<compile_context>
chip_gen: v7x
topology: tpu7x:2x2x1
jax: 0.10.0
libtpu: 0.0.40
codegen_flags: <defaults>
</compile_context>

<pallas_src>
import jax
import jax.numpy as jnp
import numpy as np
from jax.experimental import pallas as pl
from jax.experimental.pallas import tpu as pltpu


# ----------------------------------------------------------------------------- helpers


def _round_up(x, m):
    return ((x + m - 1) // m) * m


def _largest_aligned_divisor(dim, align, cap):
    """Largest d with d % align == 0, d <= cap and dim % d == 0 (dim % align == 0)."""
    cap = max(align, min(cap, dim))
    best = align
    d = align
    while d <= cap:
        if dim % d == 0:
            best = d
        d += align
    return best


def _vmem_budget_bytes():
    cap = None
    try:
        cap = getattr(pltpu.get_tpu_info(), "vmem_capacity_bytes", None)
    except Exception:
        cap = None
    if not cap:
        cap = 64 << 20  # conservative fallback: v7x has 64 MiB per TensorCore
    # Leave ~25% headroom for Mosaic-internal scratch; never ask for > 100 MiB.
    return int(min(cap * 3 // 4, 100 << 20))


def _tensorcores_per_chip():
    try:
        kind = jax.devices()[0].device_kind.lower()
    except Exception:
        return 1
    return 2 if ("v7" in kind or "7x" in kind) else 1


# ----------------------------------------------------------------------------- kernel


def _make_lora_kernel(tk, reuse_xa):
    """Build the LoRA-linear kernel.

    reuse_xa=True : x@A computed only at j == 0 and reused across N-tiles
                    (requires the j grid axis to be 'arbitrary').
    reuse_xa=False: x@A recomputed per N-tile so j may be 'parallel'
                    (keeps the second TensorCore busy for small-M calls).
    """

    def kernel(x_ref, w_ref, a_ref, b_ref, bias_ref, o_ref, acc_ref, xa_ref):
        j = pl.program_id(1)
        k = pl.program_id(2)

        x = x_ref[...]

        # Main path: (tm, tk) @ (tk, tn); contraction over the RHS sublane axis.
        xw = jnp.dot(x, w_ref[...], preferred_element_type=jnp.float32)

        # Bias folded into the k == 0 init: no zero-store, no epilogue add.
        @pl.when(k == 0)
        def _():
            acc_ref[...] = xw + bias_ref[...]

        @pl.when(k > 0)
        def _():
            acc_ref[...] += xw

        # LoRA down-projection x @ A.  A^T is VMEM-resident (constant
        # index_map), so slice the current K-chunk in-kernel rather than
        # re-streaming A from HBM every grid step.
        if reuse_xa:
            xa_first = (j == 0) & (k == 0)
            xa_rest = (j == 0) & (k > 0)
        else:
            xa_first = k == 0
            xa_rest = k > 0

        def a_chunk():
            k_start = pl.multiple_of(k * tk, tk)
            return a_ref[pl.ds(k_start, tk), :]

        @pl.when(xa_first)
        def _():
            xa_ref[...] = jnp.dot(x, a_chunk(), preferred_element_type=jnp.float32)

        @pl.when(xa_rest)
        def _():
            xa_ref[...] += jnp.dot(x, a_chunk(), preferred_element_type=jnp.float32)

        @pl.when(k == pl.num_programs(2) - 1)
        def _():
            # Up-projection (tm, r_pad) @ (r_pad, tn): cast xa down to the MXU
            # operand dtype instead of up-casting B to f32.
            lora = jnp.dot(xa_ref[...].astype(b_ref.dtype), b_ref[...],
                           preferred_element_type=jnp.float32)
            o_ref[...] = (acc_ref[...] + lora).astype(o_ref.dtype)

    return kernel


# ----------------------------------------------------------------------------- wrapper


def prepare_lora_weights(weight, bias, lora_A, lora_B, *, scaling, compute_dtype=None):
    """Pre-transpose / pre-scale / pre-cast / zero-pad the frozen parameters.

    Call this ONCE per layer and cache the result; the per-step kernel then
    streams the weights directly, with no per-call transpose/cast HBM traffic.
    """
    N, K = weight.shape
    r = lora_A.shape[0]

    K_pad = _round_up(K, 128)
    N_pad = _round_up(N, 128)
    # Pad r so the xa scratch / up-projection are lane-dense; r << K so the
    # extra bytes and FLOPs are negligible.
    r_pad = _round_up(max(r, 1), 128)

    w_t = jnp.zeros((K_pad, N_pad), jnp.float32).at[:K, :N].set(
        weight.astype(jnp.float32).T)
    a_t = jnp.zeros((K_pad, r_pad), jnp.float32).at[:K, :r].set(
        lora_A.astype(jnp.float32).T)
    # Fold the LoRA scaling into B (no per-tile multiply in the kernel).
    b_t = jnp.zeros((r_pad, N_pad), jnp.float32).at[:r, :N].set(
        jnp.float32(scaling) * lora_B.astype(jnp.float32).T)
    bias2d = jnp.zeros((1, N_pad), jnp.float32).at[0, :N].set(
        bias.astype(jnp.float32))

    if compute_dtype is not None:
        w_t = w_t.astype(compute_dtype)
        a_t = a_t.astype(compute_dtype)
        b_t = b_t.astype(compute_dtype)

    return dict(w_t=w_t, a_t=a_t, b_t=b_t, bias2d=bias2d,
                K=K, N=N, r=r, K_pad=K_pad, N_pad=N_pad, r_pad=r_pad,
                compute_dtype=compute_dtype)


def lora_linear_prepared(x, prepared, *, tm=None, tn=None, tk=None):
    """x: (..., in_features) -> (..., out_features), using cached weights."""
    K, N = prepared["K"], prepared["N"]
    K_pad, N_pad, r_pad = prepared["K_pad"], prepared["N_pad"], prepared["r_pad"]
    compute_dtype = prepared["compute_dtype"]
    w_t, a_t, b_t, bias2d = (prepared["w_t"], prepared["a_t"],
                             prepared["b_t"], prepared["bias2d"])

    orig_shape = x.shape
    assert orig_shape[-1] == K
    out_dtype = x.dtype

    x2d = x.reshape(-1, K)
    if compute_dtype is not None:
        x2d = x2d.astype(compute_dtype)
    M = x2d.shape[0]

    in_bytes = jnp.dtype(x2d.dtype).itemsize
    out_bytes = jnp.dtype(out_dtype).itemsize
    m_align = 16 if in_bytes == 2 else 8
    M_pad = _round_up(M, m_align)

    # Generation-aware tile defaults & VMEM budget.
    budget = _vmem_budget_bytes()
    if budget >= (90 << 20):                 # 128 MiB-VMEM parts (v5e / v6e)
        tm_d, tn_d, tk_d = 512, 1024, 1024
    else:                                    # 64 MiB-per-core parts (v7x)
        tm_d, tn_d, tk_d = 256, 512, 512
    tm_d = tm if tm is not None else tm_d
    tn_d = tn if tn is not None else tn_d
    tk_d = tk if tk is not None else tk_d

    tm_ = _largest_aligned_divisor(M_pad, m_align, tm_d)
    tn_ = _largest_aligned_divisor(N_pad, 128, tn_d)
    tk_ = _largest_aligned_divisor(K_pad, 128, tk_d)

    def est(tm_e, tn_e, tk_e):
        return (2 * tm_e * tk_e * in_bytes            # x (double buffered)
                + 2 * tk_e * tn_e * in_bytes          # W^T
                + 2 * K_pad * r_pad * in_bytes        # resident A^T (conservative x2)
                + 2 * r_pad * tn_e * in_bytes         # scaled B^T
                + 2 * tn_e * 4                        # bias
                + 2 * tm_e * tn_e * out_bytes         # output
                + tm_e * tn_e * 4 + tm_e * r_pad * 4)  # f32 accumulators

    # Shrink (tk, then tn, then tm) until the estimate fits the budget,
    # preserving lane (128) / sublane (8|16) alignment and divisibility.
    while est(tm_, tn_, tk_) > budget:
        if tk_ > 128:
            tk_ = _largest_aligned_divisor(K_pad, 128, tk_ // 2)
        elif tn_ > 128:
            tn_ = _largest_aligned_divisor(N_pad, 128, tn_ // 2)
        elif tm_ > m_align:
            tm_ = _largest_aligned_divisor(M_pad, m_align, tm_ // 2)
        else:
            break

    if M_pad != M or K_pad != K:
        x2d = jnp.pad(x2d, ((0, M_pad - M), (0, K_pad - K)))

    grid = (M_pad // tm_, N_pad // tn_, K_pad // tk_)

    # On multi-TensorCore chips with a single M-tile, the only "parallel" axis
    # has one tile and the second core would idle; switch to the recompute
    # variant so j can be "parallel" (costs ~r_pad/tn extra MXU work).
    reuse_xa = not (_tensorcores_per_chip() >= 2 and grid[0] < 2 and grid[1] >= 2)
    # NOTE: the j==0 reuse gate in the kernel is only valid when j is
    # "arbitrary"; the two are chosen together here.
    dim_sem = ("parallel", "arbitrary" if reuse_xa else "parallel", "arbitrary")

    vmem_limit = int(max(min(budget, 100 << 20), est(tm_, tn_, tk_) + (2 << 20)))

    out = pl.pallas_call(
        _make_lora_kernel(tk_, reuse_xa),
        out_shape=jax.ShapeDtypeStruct((M_pad, N_pad), out_dtype),
        grid_spec=pltpu.PrefetchScalarGridSpec(
            num_scalar_prefetch=0,
            grid=grid,
            in_specs=[
                pl.BlockSpec((tm_, tk_), lambda i, j, k: (i, k)),      # x
                pl.BlockSpec((tk_, tn_), lambda i, j, k: (k, j)),      # W^T (in, out)
                pl.BlockSpec((K_pad, r_pad), lambda i, j, k: (0, 0)),  # A^T resident
                pl.BlockSpec((r_pad, tn_), lambda i, j, k: (0, j)),    # scaled B^T
                pl.BlockSpec((1, tn_), lambda i, j, k: (0, j)),        # bias
            ],
            out_specs=pl.BlockSpec((tm_, tn_), lambda i, j, k: (i, j)),
            scratch_shapes=[
                pltpu.VMEM((tm_, tn_), jnp.float32),    # main accumulator
                pltpu.VMEM((tm_, r_pad), jnp.float32),  # x @ A accumulator
            ],
        ),
        compiler_params=pltpu.CompilerParams(
            dimension_semantics=dim_sem,
            vmem_limit_bytes=vmem_limit),
    )(x2d, w_t, a_t, b_t, bias2d)

    out = out[:M, :N]
    return out.reshape(*orig_shape[:-1], N)


def lora_linear(x, weight, bias, lora_A, lora_B, *, scaling,
                compute_dtype=None, tm=None, tn=None, tk=None):
    # Convenience wrapper: in a real model, call prepare_lora_weights once per
    # layer and cache the result instead of re-preparing per call.
    prepared = prepare_lora_weights(weight, bias, lora_A, lora_B,
                                    scaling=scaling, compute_dtype=compute_dtype)
    return lora_linear_prepared(x, prepared, tm=tm, tn=tn, tk=tk)


def _kaiming_uniform(key, shape, fan_in):
    # matches torch kaiming_uniform_(a=sqrt(5)) -> U(-1/sqrt(fan_in), 1/sqrt(fan_in))
    bound = 1.0 / np.sqrt(fan_in)
    return jax.random.uniform(key, shape, jnp.float32, -bound, bound)


if __name__ == "__main__":
    batch, seq = 2, 8
    in_features, out_features = 256, 128
    r, alpha = 32, 64
    scaling = alpha / r

    key = jax.random.PRNGKey(0)
    kx, kw, ka, kb, kbias = jax.random.split(key, 5)

    x = jax.random.normal(kx, (batch, seq, in_features), jnp.float32)
    weight = _kaiming_uniform(kw, (out_features, in_features), in_features)
    bias = 0.1 * jax.random.normal(kbias, (out_features,), jnp.float32)
    lora_A = _kaiming_uniform(ka, (r, in_features), in_features)
    # Module initializes lora_B to zeros; use a small nonzero B here so the
    # LoRA path is actually exercised by the correctness check.
    lora_B = 0.01 * jax.random.normal(kb, (out_features, r), jnp.float32)
    # TODO(synk): dropout=0.0 module default -> identity; stochastic
    # (training-mode) dropout is not implemented in the kernel.

    # Reference in plain JAX (f32).
    ref = (x @ weight.T + bias) + scaling * ((x @ lora_A.T) @ lora_B.T)

    # f32 operand path (exact check); weights prepared once (cacheable).
    prep_f32 = prepare_lora_weights(weight, bias, lora_A, lora_B, scaling=scaling)
    out = jax.block_until_ready(lora_linear_prepared(x, prep_f32))
    np.testing.assert_allclose(np.asarray(out), np.asarray(ref),
                               rtol=1e-5, atol=1e-5)

    # bf16 operand path (recommended on v5e/v6e/v7x MXUs), f32 accumulation.
    prep_bf16 = prepare_lora_weights(weight, bias, lora_A, lora_B,
                                     scaling=scaling, compute_dtype=jnp.bfloat16)
    out_bf16 = jax.block_until_ready(lora_linear_prepared(x, prep_bf16))
    np.testing.assert_allclose(np.asarray(out_bf16, dtype=np.float32),
                               np.asarray(ref), rtol=2e-2, atol=2e-2)

    print("KERNEL_OK")
</pallas_src>

<mosaic_0001>
module attributes {stable_mosaic.version = 11 : i64} {
  func.func @kernel(%arg0: i32, %arg1: i32, %arg2: i32, %arg3: memref<16x256xf32, #tpu.memory_space<vmem>>, %arg4: memref<256x128xf32, #tpu.memory_space<vmem>>, %arg5: memref<256x128xf32, #tpu.memory_space<vmem>>, %arg6: memref<128x128xf32, #tpu.memory_space<vmem>>, %arg7: memref<1x128xf32, #tpu.memory_space<vmem>>, %arg8: memref<16x128xf32, #tpu.memory_space<vmem>>, %arg9: memref<16x128xf32, #tpu.memory_space<vmem>>, %arg10: memref<16x128xf32, #tpu.memory_space<vmem>>) attributes {dimension_semantics = [#tpu.dimension_semantics<parallel>, #tpu.dimension_semantics<arbitrary>, #tpu.dimension_semantics<arbitrary>], iteration_bounds = array<i64: 1, 1, 1>, scalar_prefetch = 0 : i64, scratch_operands = 2 : i64, tpu.core_type = #tpu.core_type<tc>, window_params = [{transform_indices = @transform_0, window_bounds = array<i64: 16, 256>}, {transform_indices = @transform_1, window_bounds = array<i64: 256, 128>}, {pipeline_mode = #tpu.pipeline_mode<synchronous>, transform_indices = @transform_2, window_bounds = array<i64: 256, 128>}, {transform_indices = @transform_3, window_bounds = array<i64: 128, 128>}, {transform_indices = @transform_4, window_bounds = array<i64: 1, 128>}, {transform_indices = @transform_5, window_bounds = array<i64: 16, 128>}]} {
    %c0 = arith.constant 0 : index
    %c0_0 = arith.constant 0 : index
    %0 = vector.load %arg3[%c0, %c0_0] : memref<16x256xf32, #tpu.memory_space<vmem>>, vector<16x256xf32>
    %c0_1 = arith.constant 0 : index
    %c0_2 = arith.constant 0 : index
    %1 = vector.load %arg4[%c0_1, %c0_2] : memref<256x128xf32, #tpu.memory_space<vmem>>, vector<256x128xf32>
    %cst = arith.constant dense<0.000000e+00> : vector<16x128xf32>
    %2 = tpu.matmul %0, %1, %cst {dimension_numbers = #tpu.dot_dimension_numbers<[1], [0], [0], [1], [0, 0, 1, 1], [], []>} : vector<16x256xf32>, vector<256x128xf32>, vector<16x128xf32> -> vector<16x128xf32>
    %c0_i32 = arith.constant 0 : i32
    %3 = arith.cmpi eq, %arg2, %c0_i32 : i32
    %4 = arith.extui %3 : i1 to i32
    %c0_i32_3 = arith.constant 0 : i32
    %5 = arith.cmpi ne, %4, %c0_i32_3 : i32
    scf.if %5 {
      %c0_14 = arith.constant 0 : index
      %c0_15 = arith.constant 0 : index
      %22 = vector.load %arg7[%c0_14, %c0_15] : memref<1x128xf32, #tpu.memory_space<vmem>>, vector<1x128xf32>
      %23 = vector.broadcast %22 : vector<1x128xf32> to vector<16x128xf32>
      %24 = arith.addf %2, %23 : vector<16x128xf32>
      %c0_16 = arith.constant 0 : index
      %c0_17 = arith.constant 0 : index
      %25 = vector.load %arg9[%c0_16, %c0_17] : memref<16x128xf32, #tpu.memory_space<vmem>>, vector<16x128xf32>
      tpu.vector_store %arg9[%c0_16, %c0_17], %24 {strides = array<i32>} : memref<16x128xf32, #tpu.memory_space<vmem>>, vector<16x128xf32>,
    } else {
    }
    %c0_i32_4 = arith.constant 0 : i32
    %6 = arith.cmpi sgt, %arg2, %c0_i32_4 : i32
    %7 = arith.extui %6 : i1 to i32
    %c0_i32_5 = arith.constant 0 : i32
    %8 = arith.cmpi ne, %7, %c0_i32_5 : i32
    scf.if %8 {
      %c0_14 = arith.constant 0 : index
      %c0_15 = arith.constant 0 : index
      %22 = vector.load %arg9[%c0_14, %c0_15] : memref<16x128xf32, #tpu.memory_space<vmem>>, vector<16x128xf32>
      %23 = arith.addf %22, %2 : vector<16x128xf32>
      %c0_16 = arith.constant 0 : index
      %c0_17 = arith.constant 0 : index
      %24 = vector.load %arg9[%c0_16, %c0_17] : memref<16x128xf32, #tpu.memory_space<vmem>>, vector<16x128xf32>
      tpu.vector_store %arg9[%c0_16, %c0_17], %23 {strides = array<i32>} : memref<16x128xf32, #tpu.memory_space<vmem>>, vector<16x128xf32>,
    } else {
    }
    %c0_i32_6 = arith.constant 0 : i32
    %9 = arith.cmpi eq, %arg1, %c0_i32_6 : i32
    %c0_i32_7 = arith.constant 0 : i32
    %10 = arith.cmpi eq, %arg2, %c0_i32_7 : i32
    %11 = arith.andi %9, %10 : i1
    %c0_i32_8 = arith.constant 0 : i32
    %12 = arith.cmpi eq, %arg1, %c0_i32_8 : i32
    %c0_i32_9 = arith.constant 0 : i32
    %13 = arith.cmpi sgt, %arg2, %c0_i32_9 : i32
    %14 = arith.andi %12, %13 : i1
    %15 = arith.extui %11 : i1 to i32
    %c0_i32_10 = arith.constant 0 : i32
    %16 = arith.cmpi ne, %15, %c0_i32_10 : i32
    scf.if %16 {
      %c256_i32 = arith.constant 256 : i32
      %22 = arith.muli %arg2, %c256_i32 : i32
      %23 = tpu.assume_multiple %22, 256 : i32
      %24 = arith.index_cast %23 : i32 to index
      %c0_14 = arith.constant 0 : index
      %25 = vector.load %arg5[%24, %c0_14] : memref<256x128xf32, #tpu.memory_space<vmem>>, vector<256x128xf32>
      %cst_15 = arith.constant dense<0.000000e+00> : vector<16x128xf32>
      %26 = tpu.matmul %0, %25, %cst_15 {dimension_numbers = #tpu.dot_dimension_numbers<[1], [0], [0], [1], [0, 0, 1, 1], [], []>} : vector<16x256xf32>, vector<256x128xf32>, vector<16x128xf32> -> vector<16x128xf32>
      %c0_16 = arith.constant 0 : index
      %c0_17 = arith.constant 0 : index
      %27 = vector.load %arg10[%c0_16, %c0_17] : memref<16x128xf32, #tpu.memory_space<vmem>>, vector<16x128xf32>
      tpu.vector_store %arg10[%c0_16, %c0_17], %26 {strides = array<i32>} : memref<16x128xf32, #tpu.memory_space<vmem>>, vector<16x128xf32>,
    } else {
    }
    %17 = arith.extui %14 : i1 to i32
    %c0_i32_11 = arith.constant 0 : i32
    %18 = arith.cmpi ne, %17, %c0_i32_11 : i32
    scf.if %18 {
      %c0_14 = arith.constant 0 : index
      %c0_15 = arith.constant 0 : index
      %22 = vector.load %arg10[%c0_14, %c0_15] : memref<16x128xf32, #tpu.memory_space<vmem>>, vector<16x128xf32>
      %c256_i32 = arith.constant 256 : i32
      %23 = arith.muli %arg2, %c256_i32 : i32
      %24 = tpu.assume_multiple %23, 256 : i32
      %25 = arith.index_cast %24 : i32 to index
      %c0_16 = arith.constant 0 : index
      %26 = vector.load %arg5[%25, %c0_16] : memref<256x128xf32, #tpu.memory_space<vmem>>, vector<256x128xf32>
      %cst_17 = arith.constant dense<0.000000e+00> : vector<16x128xf32>
      %27 = tpu.matmul %0, %26, %cst_17 {dimension_numbers = #tpu.dot_dimension_numbers<[1], [0], [0], [1], [0, 0, 1, 1], [], []>} : vector<16x256xf32>, vector<256x128xf32>, vector<16x128xf32> -> vector<16x128xf32>
      %28 = arith.addf %22, %27 : vector<16x128xf32>
      %c0_18 = arith.constant 0 : index
      %c0_19 = arith.constant 0 : index
      %29 = vector.load %arg10[%c0_18, %c0_19] : memref<16x128xf32, #tpu.memory_space<vmem>>, vector<16x128xf32>
      tpu.vector_store %arg10[%c0_18, %c0_19], %28 {strides = array<i32>} : memref<16x128xf32, #tpu.memory_space<vmem>>, vector<16x128xf32>,
    } else {
    }
    %c0_i32_12 = arith.constant 0 : i32
    %19 = arith.cmpi eq, %arg2, %c0_i32_12 : i32
    %20 = arith.extui %19 : i1 to i32
    %c0_i32_13 = arith.constant 0 : i32
    %21 = arith.cmpi ne, %20, %c0_i32_13 : i32
    scf.if %21 {
      %c0_14 = arith.constant 0 : index
      %c0_15 = arith.constant 0 : index
      %22 = vector.load %arg10[%c0_14, %c0_15] : memref<16x128xf32, #tpu.memory_space<vmem>>, vector<16x128xf32>
      %c0_16 = arith.constant 0 : index
      %c0_17 = arith.constant 0 : index
      %23 = vector.load %arg6[%c0_16, %c0_17] : memref<128x128xf32, #tpu.memory_space<vmem>>, vector<128x128xf32>
      %cst_18 = arith.constant dense<0.000000e+00> : vector<16x128xf32>
      %24 = tpu.matmul %22, %23, %cst_18 {dimension_numbers = #tpu.dot_dimension_numbers<[1], [0], [0], [1], [0, 0, 1, 1], [], []>} : vector<16x128xf32>, vector<128x128xf32>, vector<16x128xf32> -> vector<16x128xf32>
      %c0_19 = arith.constant 0 : index
      %c0_20 = arith.constant 0 : index
      %25 = vector.load %arg9[%c0_19, %c0_20] : memref<16x128xf32, #tpu.memory_space<vmem>>, vector<16x128xf32>
      %26 = arith.addf %25, %24 : vector<16x128xf32>
      %c0_21 = arith.constant 0 : index
      %c0_22 = arith.constant 0 : index
      %27 = vector.load %arg8[%c0_21, %c0_22] : memref<16x128xf32, #tpu.memory_space<vmem>>, vector<16x128xf32>
      tpu.vector_store %arg8[%c0_21, %c0_22], %26 {strides = array<i32>} : memref<16x128xf32, #tpu.memory_space<vmem>>, vector<16x128xf32>,
    } else {
    }
    return
  }
  func.func @transform_0(%arg0: i32, %arg1: i32, %arg2: i32) -> (i32, i32) {
    %c0_i32 = arith.constant 0 : i32
    return %arg0, %arg2 : i32, i32
  }
  func.func @transform_1(%arg0: i32, %arg1: i32, %arg2: i32) -> (i32, i32) {
    %c0_i32 = arith.constant 0 : i32
    return %arg2, %arg1 : i32, i32
  }
  func.func @transform_2(%arg0: i32, %arg1: i32, %arg2: i32) -> (i32, i32) {
    %c0_i32 = arith.constant 0 : i32
    %c0_i32_0 = arith.constant 0 : i32
    %c0_i32_1 = arith.constant 0 : i32
    return %c0_i32, %c0_i32_0 : i32, i32
  }
  func.func @transform_3(%arg0: i32, %arg1: i32, %arg2: i32) -> (i32, i32) {
    %c0_i32 = arith.constant 0 : i32
    %c0_i32_0 = arith.constant 0 : i32
    return %c0_i32, %arg1 : i32, i32
  }
  func.func @transform_4(%arg0: i32, %arg1: i32, %arg2: i32) -> (i32, i32) {
    %c0_i32 = arith.constant 0 : i32
    %c0_i32_0 = arith.constant 0 : i32
    return %c0_i32, %arg1 : i32, i32
  }
  func.func @transform_5(%arg0: i32, %arg1: i32, %arg2: i32) -> (i32, i32) {
    %c0_i32 = arith.constant 0 : i32
    return %arg0, %arg1 : i32, i32
  }
}

</mosaic_0001>

<llo_original>
// kernel: tpu_custom_call.1
$region0: #{tpu_custom_call.1}
  #allocation0 [shape = 'u32[]', space=smem, size = 0x4, offset = 0x4, fixed_abs, tag = 'smem constant byte address 0x4 - core index']
  #allocation1 [shape = 'u32[144,128]{1,0:T(1,128)}', space=vmem, size = 0x12000, scoped, tag = 'internal scratch']
  #allocation2 [shape = 'f32[16,128]{1,0:T(8,128)}', space=vmem, size = 0x2000, scoped, tag = 'scratch operand']
  #allocation3 [shape = 'f32[16,128]{1,0:T(8,128)}', space=vmem, size = 0x2000, scoped, tag = 'scratch operand']
  %s0 = inlined_call_operand.hbm [shape: f32[16,256], index: 0, kind: input, shape index: {}]
  %s1 = inlined_call_operand.hbm [shape: f32[256,128], index: 1, kind: input, shape index: {}]
  %s2 = inlined_call_operand.hbm [shape: f32[256,128], index: 2, kind: input, shape index: {}]
  %s3 = inlined_call_operand.hbm [shape: f32[128,128], index: 3, kind: input, shape index: {}]
  %s4 = inlined_call_operand.vmem [shape: f32[1,128], index: 4, kind: input, shape index: {}]
  %s5 = inlined_call_operand.hbm [shape: f32[16,128], index: 5, kind: output, shape index: {}]
  %s6 = sld [smem:[#allocation0]]
  $region66: #{tpu_custom_call.1} parent=0
    _
  %s8 = ssub.s32 1, %s6
  %s9 = scalar_select 0, %s8, %s6
  $region1: #{tpu_custom_call.1} parent=0
    #allocation4 [shape = 'u8[16384]{0}', space=vmem, size = 0x4000, scoped, tag = 'input window, operand 0, single buffered']
    #allocation5 [shape = 's32[1]{0}', space=sflag, size = 0x4, scoped, tag = 'scoped memory for tpu_custom_call.1']
    #allocation6 [shape = 's32[1]{0}', space=sflag, size = 0x4, scoped, tag = 'scoped memory for tpu_custom_call.1']
    #allocation7 [shape = 'u8[131072]{0}', space=vmem, size = 0x20000, scoped, tag = 'input window, operand 1, single buffered']
    #allocation8 [shape = 's32[1]{0}', space=sflag, size = 0x4, scoped, tag = 'scoped memory for tpu_custom_call.1']
    #allocation9 [shape = 'u8[131072]{0}', space=vmem, size = 0x20000, scoped, tag = 'input window, operand 2, single buffered']
    #allocation10 [shape = 'u8[65536]{0}', space=vmem, size = 0x10000, scoped, tag = 'input window, operand 3, single buffered']
    #allocation11 [shape = 's32[1]{0}', space=sflag, size = 0x4, scoped, tag = 'scoped memory for tpu_custom_call.1']
    #allocation12 [shape = 'u8[8192]{0}', space=vmem, size = 0x2000, scoped, tag = 'output window, operand 0, single buffered']
    %10 = vsyncpa [#allocation5], 0
    %11 = vsyncpa [#allocation8], 0
    %12 = vsyncpa [#allocation11], 0
    %13 = vsyncpa [#allocation6], 0
    // Predicated region
    $region2: #{tpu_custom_call.1} parent=1 // pred_check
      _
    $region3: #{tpu_custom_call.1} parent=1 // pred_check_branch
      %15 = sbr.rel (0) target = $region5
    $region4: #{tpu_custom_call.1} parent=1 // pred_region
      %s17 = ssub.s32 512, 512
      %18 = vsyncadd [#allocation5], %s17
      %s19 = sshll.u32 [#allocation4], 4
      %s20 = int_to_ptr.vmem [resolvable:$true] %s19
      %25 = dma.hbm_to_vmem [thread:$0]  %s0, 512, %s20, [#allocation5], 256, 256, 16
    $region5: #{tpu_custom_call.1} parent=1 // pred_fallthru
      _
    // Predicated region
    $region6: #{tpu_custom_call.1} parent=1 // pred_check
      _
    $region7: #{tpu_custom_call.1} parent=1 // pred_check_branch
      %27 = sbr.rel (0) target = $region9
    $region8: #{tpu_custom_call.1} parent=1 // pred_region
      %s29 = ssub.s32 4096, 4096
      %30 = vsyncadd [#allocation8], %s29
      %s31 = sshll.u32 [#allocation7], 4
      %s32 = int_to_ptr.vmem [resolvable:$true] %s31
      %37 = dma.hbm_to_vmem [thread:$0]  %s1, 4096, %s32, [#allocation8], 128, 128, 8
    $region9: #{tpu_custom_call.1} parent=1 // pred_fallthru
      _
    // Predicated region
    $region10: #{tpu_custom_call.1} parent=1 // pred_check
      _
    $region11: #{tpu_custom_call.1} parent=1 // pred_check_branch
      %39 = sbr.rel (0) target = $region13
    $region12: #{tpu_custom_call.1} parent=1 // pred_region
      %s41 = ssub.s32 4096, 4096
      %42 = vsyncadd [#allocation8], %s41
      %s43 = sshll.u32 [#allocation9], 4
      %s44 = int_to_ptr.vmem [resolvable:$true] %s43
      %49 = dma.hbm_to_vmem [thread:$0]  %s2, 4096, %s44, [#allocation8], 128, 128, 8
    $region13: #{tpu_custom_call.1} parent=1 // pred_fallthru
      _
    // Predicated region
    $region14: #{tpu_custom_call.1} parent=1 // pred_check
      _
    $region15: #{tpu_custom_call.1} parent=1 // pred_check_branch
      %51 = sbr.rel (0) target = $region17
    $region16: #{tpu_custom_call.1} parent=1 // pred_region
      %s53 = ssub.s32 2048, 2048
      %54 = vsyncadd [#allocation11], %s53
      %s55 = sshll.u32 [#allocation10], 4
      %s56 = int_to_ptr.vmem [resolvable:$true] %s55
      %61 = dma.hbm_to_vmem [thread:$0]  %s3, 2048, %s56, [#allocation11], 128, 128, 8
    $region17: #{tpu_custom_call.1} parent=1 // pred_fallthru
      _
    // Predicated region
    $region18: #{tpu_custom_call.1} parent=1 // pred_check
      _
    $region19: #{tpu_custom_call.1} parent=1 // pred_check_branch
      %63 = sbr.rel (0) target = $region21
    $region20: #{tpu_custom_call.1} parent=1 // pred_region
      _
    $region21: #{tpu_custom_call.1} parent=1 // pred_fallthru
      _
    // Predicated region
    $region22: #{tpu_custom_call.1} parent=1 // pred_check
      _
    $region23: #{tpu_custom_call.1} parent=1 // pred_check_branch
      %65 = sbr.rel (0) target = $region25
    $region24: #{tpu_custom_call.1} parent=1 // pred_region
      %66 = dma.done [#allocation5], 512
    $region25: #{tpu_custom_call.1} parent=1 // pred_fallthru
      _
    // Predicated region
    $region26: #{tpu_custom_call.1} parent=1 // pred_check
      _
    $region27: #{tpu_custom_call.1} parent=1 // pred_check_branch
      %68 = sbr.rel (0) target = $region29
    $region28: #{tpu_custom_call.1} parent=1 // pred_region
      %69 = dma.done [#allocation8], 4096
    $region29: #{tpu_custom_call.1} parent=1 // pred_fallthru
      _
    // Predicated region
    $region30: #{tpu_custom_call.1} parent=1 // pred_check
      _
    $region31: #{tpu_custom_call.1} parent=1 // pred_check_branch
      %71 = sbr.rel (0) target = $region33
    $region32: #{tpu_custom_call.1} parent=1 // pred_region
      %72 = dma.done [#allocation8], 4096
    $region33: #{tpu_custom_call.1} parent=1 // pred_fallthru
      _
    // Predicated region
    $region34: #{tpu_custom_call.1} parent=1 // pred_check
      _
    $region35: #{tpu_custom_call.1} parent=1 // pred_check_branch
      %74 = sbr.rel (0) target = $region37
    $region36: #{tpu_custom_call.1} parent=1 // pred_region
      %75 = dma.done [#allocation11], 2048
    $region37: #{tpu_custom_call.1} parent=1 // pred_fallthru
      _
    %v76 = vld [vmem:[#allocation4] sm:$0xff]
    %v77 = vld [vmem:[#allocation4 + $0x8] sm:$0xff]
    %v78 = vld [vmem:[#allocation4 + $0x10] sm:$0xff]
    %v79 = vld [vmem:[#allocation4 + $0x18] sm:$0xff]
    %v80 = vld [vmem:[#allocation7] sm:$0xff]
    %v81 = vld [vmem:[#allocation7 + $0x8] sm:$0xff]
    %v82 = vld [vmem:[#allocation7 + $0x10] sm:$0xff]
    %v83 = vld [vmem:[#allocation7 + $0x18] sm:$0xff]
    %v84 = vld [vmem:[#allocation7 + $0x20] sm:$0xff]
    %v85 = vld [vmem:[#allocation7 + $0x28] sm:$0xff]
    %v86 = vld [vmem:[#allocation7 + $0x30] sm:$0xff]
    %v87 = vld [vmem:[#allocation7 + $0x38] sm:$0xff]
    %v88 = vld [vmem:[#allocation7 + $0x40] sm:$0xff]
    %v89 = vld [vmem:[#allocation7 + $0x48] sm:$0xff]
    %v90 = vld [vmem:[#allocation7 + $0x50] sm:$0xff]
    %v91 = vld [vmem:[#allocation7 + $0x58] sm:$0xff]
    %v92 = vld [vmem:[#allocation7 + $0x60] sm:$0xff]
    %v93 = vld [vmem:[#allocation7 + $0x68] sm:$0xff]
    %v94 = vld [vmem:[#allocation7 + $0x70] sm:$0xff]
    %v95 = vld [vmem:[#allocation7 + $0x78] sm:$0xff]
    %v96 = vld [vmem:[#allocation7 + $0x80] sm:$0xff]
    %v97 = vld [vmem:[#allocation7 + $0x88] sm:$0xff]
    %v98 = vld [vmem:[#allocation7 + $0x90] sm:$0xff]
    %v99 = vld [vmem:[#allocation7 + $0x98] sm:$0xff]
    %v100 = vld [vmem:[#allocation7 + $0xa0] sm:$0xff]
    %v101 = vld [vmem:[#allocation7 + $0xa8] sm:$0xff]
    %v102 = vld [vmem:[#allocation7 + $0xb0] sm:$0xff]
    %v103 = vld [vmem:[#allocation7 + $0xb8] sm:$0xff]
    %v104 = vld [vmem:[#allocation7 + $0xc0] sm:$0xff]
    %v105 = vld [vmem:[#allocation7 + $0xc8] sm:$0xff]
    %v106 = vld [vmem:[#allocation7 + $0xd0] sm:$0xff]
    %v107 = vld [vmem:[#allocation7 + $0xd8] sm:$0xff]
    %v108 = vld [vmem:[#allocation7 + $0xe0] sm:$0xff]
    %v109 = vld [vmem:[#allocation7 + $0xe8] sm:$0xff]
    %v110 = vld [vmem:[#allocation7 + $0xf0] sm:$0xff]
    %v111 = vld [vmem:[#allocation7 + $0xf8] sm:$0xff]
    %112 = vmatprep.subr.mxu0 0.0
    %113 = vmatpush1.msra.mxu0 %v80
    %114 = vmatprep.subr.mxu0 0.0
    %115 = vmatpush1.msra.mxu0 %v81
    %116 = vmatprep.subr.mxu0 0.0
    %117 = vmatpush1.msra.mxu0 %v82
    %118 = vmatprep.subr.mxu0 0.0
    %119 = vmatpush1.msra.mxu0 %v83
    %120 = vmatprep.subr.mxu0 0.0
    %121 = vmatpush1.msra.mxu0 %v84
    %122 = vmatprep.subr.mxu0 0.0
    %123 = vmatpush1.msra.mxu0 %v85
    %124 = vmatprep.subr.mxu0 0.0
    %125 = vmatpush1.msra.mxu0 %v86
    %126 = vmatprep.subr.mxu0 0.0
    %127 = vmatpush1.msra.mxu0 %v87
    %128 = vmatprep.subr.mxu0 0.0
    %129 = vmatpush1.msra.mxu0 %v88
    %130 = vmatprep.subr.mxu0 0.0
    %131 = vmatpush1.msra.mxu0 %v89
    %132 = vmatprep.subr.mxu0 0.0
    %133 = vmatpush1.msra.mxu0 %v90
    %134 = vmatprep.subr.mxu0 0.0
    %135 = vmatpush1.msra.mxu0 %v91
    %136 = vmatprep.subr.mxu0 0.0
    %137 = vmatpush1.msra.mxu0 %v92
    %138 = vmatprep.subr.mxu0 0.0
    %139 = vmatpush1.msra.mxu0 %v93
    %140 = vmatprep.subr.mxu0 0.0
    %141 = vmatpush1.msra.mxu0 %v94
    %142 = vmatprep.subr.mxu0 0.0
    %143 = vmatpush1.msra.mxu0 %v95
    %144 = vmatprep.subr.mxu0 0.0
    %145 = vmatpush1.msra.mxu0 %v96
    %146 = vmatprep.subr.mxu0 0.0
    %147 = vmatpush1.msra.mxu0 %v97
    %148 = vmatprep.subr.mxu0 0.0
    %149 = vmatpush1.msra.mxu0 %v98
    %150 = vmatprep.subr.mxu0 0.0
    %151 = vmatpush1.msra.mxu0 %v99
    %152 = vmatprep.subr.mxu0 0.0
    %153 = vmatpush1.msra.mxu0 %v100
    %154 = vmatprep.subr.mxu0 0.0
    %155 = vmatpush1.msra.mxu0 %v101
    %156 = vmatprep.subr.mxu0 0.0
    %157 = vmatpush1.msra.mxu0 %v102
    %158 = vmatprep.subr.mxu0 0.0
    %159 = vmatpush1.msra.mxu0 %v103
    %160 = vmatprep.subr.mxu0 0.0
    %161 = vmatpush1.msra.mxu0 %v104
    %162 = vmatprep.subr.mxu0 0.0
    %163 = vmatpush1.msra.mxu0 %v105
    %164 = vmatprep.subr.mxu0 0.0
    %165 = vmatpush1.msra.mxu0 %v106
    %166 = vmatprep.subr.mxu0 0.0
    %167 = vmatpush1.msra.mxu0 %v107
    %168 = vmatprep.subr.mxu0 0.0
    %169 = vmatpush1.msra.mxu0 %v108
    %170 = vmatprep.subr.mxu0 0.0
    %171 = vmatpush1.msra.mxu0 %v109
    %172 = vmatprep.subr.mxu0 0.0
    %173 = vmatpush1.msra.mxu0 %v110
    %174 = vmatprep.subr.mxu0 0.0
    %175 = vmatpush1.msra.mxu0 %v111
    %176 = vmatprep.mubr.f32.mxu0 %v77
    %177 = vmatmul.mubr.f32.gmra.mrb[0].mxu0 %v76
    %v178 = vpop.f32.mrb[0].mxu0
    %v179 = vadd.f32 0.0, %v178
    %v180 = vpop.f32.mrb[0].mxu0
    %181 = vmatprep.mubr.f32.mxu0 %v79
    %182 = vmatmul.mubr.f32.gmra.mrb[0].mxu0 %v78
    %v183 = vpop.f32.mrb[0].mxu0
    %v184 = vadd.f32 0.0, %v183
    %v185 = vpop.f32.mrb[0].mxu0
    %186 = vdwg.mxu0
    %p187 = scmp.eq.s32.totalorder 0, 0
    // Predicated region
    $region38: #{tpu_custom_call.1} parent=1 // pred_check
      %p188 = pneg %p187
    $region39: #{tpu_custom_call.1} parent=1 // pred_check_branch
      %190 = sbr.rel (%p188) target = $region41
    $region40: #{tpu_custom_call.1} parent=1 // pred_region
      %v191 = vld [vmem:[%s4] sm:$0x1]
      %v193 = vlaneseq
      %v194 = vshrl.u32 %v193, 7
      %v195 = vsub.s32 0, %v194
      %v196 = vrot.slane %v191, %v195
      %v198 = vadd.f32 %v179, %v196
      %v199 = vadd.f32 %v184, %v196
      %200 = vst [vmem:[#allocation2] sm:$0xff] %v198
      %201 = vst [vmem:[#allocation2 + $0x8] sm:$0xff] %v199
    $region41: #{tpu_custom_call.1} parent=1 // pred_fallthru
      _
    %p202 = scmp.gt.s32.totalorder 0, 0
    // Predicated region
    $region42: #{tpu_custom_call.1} parent=1 // pred_check
      %p203 = pneg %p202
    $region43: #{tpu_custom_call.1} parent=1 // pred_check_branch
      %205 = sbr.rel (%p203) target = $region45
    $region44: #{tpu_custom_call.1} parent=1 // pred_region
      %v206 = vld [vmem:[#allocation2] sm:$0xff]
      %v207 = vld [vmem:[#allocation2 + $0x8] sm:$0xff]
      %v208 = vadd.f32 %v206, %v179
      %v209 = vadd.f32 %v207, %v184
      %210 = vst [vmem:[#allocation2] sm:$0xff] %v208
      %211 = vst [vmem:[#allocation2 + $0x8] sm:$0xff] %v209
    $region45: #{tpu_custom_call.1} parent=1 // pred_fallthru
      _
    %p212 = scmp.eq.s32.totalorder 0, 0
    %p213 = pnand %p212, %p187
    %p214 = pneg %p213
    %p215 = pnand %p212, %p202
    %p216 = pneg %p215
    // Predicated region
    $region46: #{tpu_custom_call.1} parent=1 // pred_check
      _
    $region47: #{tpu_custom_call.1} parent=1 // pred_check_branch
      %218 = sbr.rel (%p213) target = $region49
    $region48: #{tpu_custom_call.1} parent=1 // pred_region
      %s219 = smul.u32 0, 256
      %s220 = scalar_lea.vmem [#allocation9], %s219
      %v221 = vld [vmem:[%s220] sm:$0xff]
      %v222 = vld [vmem:[%s220 + $0x8] sm:$0xff]
      %v223 = vld [vmem:[%s220 + $0x10] sm:$0xff]
      %v224 = vld [vmem:[%s220 + $0x18] sm:$0xff]
      %v225 = vld [vmem:[%s220 + $0x20] sm:$0xff]
      %v226 = vld [vmem:[%s220 + $0x28] sm:$0xff]
      %v227 = vld [vmem:[%s220 + $0x30] sm:$0xff]
      %v228 = vld [vmem:[%s220 + $0x38] sm:$0xff]
      %v229 = vld [vmem:[%s220 + $0x40] sm:$0xff]
      %v230 = vld [vmem:[%s220 + $0x48] sm:$0xff]
      %v231 = vld [vmem:[%s220 + $0x50] sm:$0xff]
      %v232 = vld [vmem:[%s220 + $0x58] sm:$0xff]
      %v233 = vld [vmem:[%s220 + $0x60] sm:$0xff]
      %v234 = vld [vmem:[%s220 + $0x68] sm:$0xff]
      %v235 = vld [vmem:[%s220 + $0x70] sm:$0xff]
      %v236 = vld [vmem:[%s220 + $0x78] sm:$0xff]
      %v237 = vld [vmem:[%s220 + $0x80] sm:$0xff]
      %v238 = vld [vmem:[%s220 + $0x88] sm:$0xff]
      %v239 = vld [vmem:[%s220 + $0x90] sm:$0xff]
      %v240 = vld [vmem:[%s220 + $0x98] sm:$0xff]
      %v241 = vld [vmem:[%s220 + $0xa0] sm:$0xff]
      %v242 = vld [vmem:[%s220 + $0xa8] sm:$0xff]
      %v243 = vld [vmem:[%s220 + $0xb0] sm:$0xff]
      %v244 = vld [vmem:[%s220 + $0xb8] sm:$0xff]
      %v245 = vld [vmem:[%s220 + $0xc0] sm:$0xff]
      %v246 = vld [vmem:[%s220 + $0xc8] sm:$0xff]
      %v247 = vld [vmem:[%s220 + $0xd0] sm:$0xff]
      %v248 = vld [vmem:[%s220 + $0xd8] sm:$0xff]
      %v249 = vld [vmem:[%s220 + $0xe0] sm:$0xff]
      %v250 = vld [vmem:[%s220 + $0xe8] sm:$0xff]
      %v251 = vld [vmem:[%s220 + $0xf0] sm:$0xff]
      %v252 = vld [vmem:[%s220 + $0xf8] sm:$0xff]
      %253 = vmatprep.subr.mxu0 0.0
      %254 = vmatpush1.msra.mxu0 %v221
      %255 = vmatprep.subr.mxu0 0.0
      %256 = vmatpush1.msra.mxu0 %v222
      %257 = vmatprep.subr.mxu0 0.0
      %258 = vmatpush1.msra.mxu0 %v223
      %259 = vmatprep.subr.mxu0 0.0
      %260 = vmatpush1.msra.mxu0 %v224
      %261 = vmatprep.subr.mxu0 0.0
      %262 = vmatpush1.msra.mxu0 %v225
      %263 = vmatprep.subr.mxu0 0.0
      %264 = vmatpush1.msra.mxu0 %v226
      %265 = vmatprep.subr.mxu0 0.0
      %266 = vmatpush1.msra.mxu0 %v227
      %267 = vmatprep.subr.mxu0 0.0
      %268 = vmatpush1.msra.mxu0 %v228
      %269 = vmatprep.subr.mxu0 0.0
      %270 = vmatpush1.msra.mxu0 %v229
      %271 = vmatprep.subr.mxu0 0.0
      %272 = vmatpush1.msra.mxu0 %v230
      %273 = vmatprep.subr.mxu0 0.0
      %274 = vmatpush1.msra.mxu0 %v231
      %275 = vmatprep.subr.mxu0 0.0
      %276 = vmatpush1.msra.mxu0 %v232
      %277 = vmatprep.subr.mxu0 0.0
      %278 = vmatpush1.msra.mxu0 %v233
      %279 = vmatprep.subr.mxu0 0.0
      %280 = vmatpush1.msra.mxu0 %v234
      %281 = vmatprep.subr.mxu0 0.0
      %282 = vmatpush1.msra.mxu0 %v235
      %283 = vmatprep.subr.mxu0 0.0
      %284 = vmatpush1.msra.mxu0 %v236
      %285 = vmatprep.subr.mxu0 0.0
      %286 = vmatpush1.msra.mxu0 %v237
      %287 = vmatprep.subr.mxu0 0.0
      %288 = vmatpush1.msra.mxu0 %v238
      %289 = vmatprep.subr.mxu0 0.0
      %290 = vmatpush1.msra.mxu0 %v239
      %291 = vmatprep.subr.mxu0 0.0
      %292 = vmatpush1.msra.mxu0 %v240
      %293 = vmatprep.subr.mxu0 0.0
      %294 = vmatpush1.msra.mxu0 %v241
      %295 = vmatprep.subr.mxu0 0.0
      %296 = vmatpush1.msra.mxu0 %v242
      %297 = vmatprep.subr.mxu0 0.0
      %298 = vmatpush1.msra.mxu0 %v243
      %299 = vmatprep.subr.mxu0 0.0
      %300 = vmatpush1.msra.mxu0 %v244
      %301 = vmatprep.subr.mxu0 0.0
      %302 = vmatpush1.msra.mxu0 %v245
      %303 = vmatprep.subr.mxu0 0.0
      %304 = vmatpush1.msra.mxu0 %v246
      %305 = vmatprep.subr.mxu0 0.0
      %306 = vmatpush1.msra.mxu0 %v247
      %307 = vmatprep.subr.mxu0 0.0
      %308 = vmatpush1.msra.mxu0 %v248
      %309 = vmatprep.subr.mxu0 0.0
      %310 = vmatpush1.msra.mxu0 %v249
      %311 = vmatprep.subr.mxu0 0.0
      %312 = vmatpush1.msra.mxu0 %v250
      %313 = vmatprep.subr.mxu0 0.0
      %314 = vmatpush1.msra.mxu0 %v251
      %315 = vmatprep.subr.mxu0 0.0
      %316 = vmatpush1.msra.mxu0 %v252
      %317 = vmatprep.mubr.f32.mxu0 %v77
      %318 = vmatmul.mubr.f32.gmra.mrb[0].mxu0 %v76
      %v319 = vpop.f32.mrb[0].mxu0
      %v320 = vadd.f32 0.0, %v319
      %v321 = vpop.f32.mrb[0].mxu0
      %322 = vmatprep.mubr.f32.mxu0 %v79
      %323 = vmatmul.mubr.f32.gmra.mrb[0].mxu0 %v78
      %v324 = vpop.f32.mrb[0].mxu0
      %v325 = vadd.f32 0.0, %v324
      %v326 = vpop.f32.mrb[0].mxu0
      %327 = vdwg.mxu0
      %328 = vst [vmem:[#allocation3] sm:$0xff] %v320
      %329 = vst [vmem:[#allocation3 + $0x8] sm:$0xff] %v325
    $region49: #{tpu_custom_call.1} parent=1 // pred_fallthru
      _
    // Predicated region
    $region50: #{tpu_custom_call.1} parent=1 // pred_check
      _
    $region51: #{tpu_custom_call.1} parent=1 // pred_check_branch
      %331 = sbr.rel (%p215) target = $region53
    $region52: #{tpu_custom_call.1} parent=1 // pred_region
      %v332 = vld [vmem:[#allocation3] sm:$0xff]
      %v333 = vld [vmem:[#allocation3 + $0x8] sm:$0xff]
      %s334 = smul.u32 0, 256
      %s335 = scalar_lea.vmem [#allocation9], %s334
      %v336 = vld [vmem:[%s335] sm:$0xff]
      %v337 = vld [vmem:[%s335 + $0x8] sm:$0xff]
      %v338 = vld [vmem:[%s335 + $0x10] sm:$0xff]
      %v339 = vld [vmem:[%s335 + $0x18] sm:$0xff]
      %v340 = vld [vmem:[%s335 + $0x20] sm:$0xff]
      %v341 = vld [vmem:[%s335 + $0x28] sm:$0xff]
      %v342 = vld [vmem:[%s335 + $0x30] sm:$0xff]
      %v343 = vld [vmem:[%s335 + $0x38] sm:$0xff]
      %v344 = vld [vmem:[%s335 + $0x40] sm:$0xff]
      %v345 = vld [vmem:[%s335 + $0x48] sm:$0xff]
      %v346 = vld [vmem:[%s335 + $0x50] sm:$0xff]
      %v347 = vld [vmem:[%s335 + $0x58] sm:$0xff]
      %v348 = vld [vmem:[%s335 + $0x60] sm:$0xff]
      %v349 = vld [vmem:[%s335 + $0x68] sm:$0xff]
      %v350 = vld [vmem:[%s335 + $0x70] sm:$0xff]
      %v351 = vld [vmem:[%s335 + $0x78] sm:$0xff]
      %v352 = vld [vmem:[%s335 + $0x80] sm:$0xff]
      %v353 = vld [vmem:[%s335 + $0x88] sm:$0xff]
      %v354 = vld [vmem:[%s335 + $0x90] sm:$0xff]
      %v355 = vld [vmem:[%s335 + $0x98] sm:$0xff]
      %v356 = vld [vmem:[%s335 + $0xa0] sm:$0xff]
      %v357 = vld [vmem:[%s335 + $0xa8] sm:$0xff]
      %v358 = vld [vmem:[%s335 + $0xb0] sm:$0xff]
      %v359 = vld [vmem:[%s335 + $0xb8] sm:$0xff]
      %v360 = vld [vmem:[%s335 + $0xc0] sm:$0xff]
      %v361 = vld [vmem:[%s335 + $0xc8] sm:$0xff]
      %v362 = vld [vmem:[%s335 + $0xd0] sm:$0xff]
      %v363 = vld [vmem:[%s335 + $0xd8] sm:$0xff]
      %v364 = vld [vmem:[%s335 + $0xe0] sm:$0xff]
      %v365 = vld [vmem:[%s335 + $0xe8] sm:$0xff]
      %v366 = vld [vmem:[%s335 + $0xf0] sm:$0xff]
      %v367 = vld [vmem:[%s335 + $0xf8] sm:$0xff]
      %368 = vmatprep.subr.mxu0 0.0
      %369 = vmatpush1.msra.mxu0 %v336
      %370 = vmatprep.subr.mxu0 0.0
      %371 = vmatpush1.msra.mxu0 %v337
      %372 = vmatprep.subr.mxu0 0.0
      %373 = vmatpush1.msra.mxu0 %v338
      %374 = vmatprep.subr.mxu0 0.0
      %375 = vmatpush1.msra.mxu0 %v339
      %376 = vmatprep.subr.mxu0 0.0
      %377 = vmatpush1.msra.mxu0 %v340
      %378 = vmatprep.subr.mxu0 0.0
      %379 = vmatpush1.msra.mxu0 %v341
      %380 = vmatprep.subr.mxu0 0.0
      %381 = vmatpush1.msra.mxu0 %v342
      %382 = vmatprep.subr.mxu0 0.0
      %383 = vmatpush1.msra.mxu0 %v343
      %384 = vmatprep.subr.mxu0 0.0
      %385 = vmatpush1.msra.mxu0 %v344
      %386 = vmatprep.subr.mxu0 0.0
      %387 = vmatpush1.msra.mxu0 %v345
      %388 = vmatprep.subr.mxu0 0.0
      %389 = vmatpush1.msra.mxu0 %v346
      %390 = vmatprep.subr.mxu0 0.0
      %391 = vmatpush1.msra.mxu0 %v347
      %392 = vmatprep.subr.mxu0 0.0
      %393 = vmatpush1.msra.mxu0 %v348
      %394 = vmatprep.subr.mxu0 0.0
      %395 = vmatpush1.msra.mxu0 %v349
      %396 = vmatprep.subr.mxu0 0.0
      %397 = vmatpush1.msra.mxu0 %v350
      %398 = vmatprep.subr.mxu0 0.0
      %399 = vmatpush1.msra.mxu0 %v351
      %400 = vmatprep.subr.mxu0 0.0
      %401 = vmatpush1.msra.mxu0 %v352
      %402 = vmatprep.subr.mxu0 0.0
      %403 = vmatpush1.msra.mxu0 %v353
      %404 = vmatprep.subr.mxu0 0.0
      %405 = vmatpush1.msra.mxu0 %v354
      %406 = vmatprep.subr.mxu0 0.0
      %407 = vmatpush1.msra.mxu0 %v355
      %408 = vmatprep.subr.mxu0 0.0
      %409 = vmatpush1.msra.mxu0 %v356
      %410 = vmatprep.subr.mxu0 0.0
      %411 = vmatpush1.msra.mxu0 %v357
      %412 = vmatprep.subr.mxu0 0.0
      %413 = vmatpush1.msra.mxu0 %v358
      %414 = vmatprep.subr.mxu0 0.0
      %415 = vmatpush1.msra.mxu0 %v359
      %416 = vmatprep.subr.mxu0 0.0
      %417 = vmatpush1.msra.mxu0 %v360
      %418 = vmatprep.subr.mxu0 0.0
      %419 = vmatpush1.msra.mxu0 %v361
      %420 = vmatprep.subr.mxu0 0.0
      %421 = vmatpush1.msra.mxu0 %v362
      %422 = vmatprep.subr.mxu0 0.0
      %423 = vmatpush1.msra.mxu0 %v363
      %424 = vmatprep.subr.mxu0 0.0
      %425 = vmatpush1.msra.mxu0 %v364
      %426 = vmatprep.subr.mxu0 0.0
      %427 = vmatpush1.msra.mxu0 %v365
      %428 = vmatprep.subr.mxu0 0.0
      %429 = vmatpush1.msra.mxu0 %v366
      %430 = vmatprep.subr.mxu0 0.0
      %431 = vmatpush1.msra.mxu0 %v367
      %432 = vmatprep.mubr.f32.mxu0 %v77
      %433 = vmatmul.mubr.f32.gmra.mrb[0].mxu0 %v76
      %v434 = vpop.f32.mrb[0].mxu0
      %v435 = vadd.f32 0.0, %v434
      %v436 = vpop.f32.mrb[0].mxu0
      %437 = vmatprep.mubr.f32.mxu0 %v79
      %438 = vmatmul.mubr.f32.gmra.mrb[0].mxu0 %v78
      %v439 = vpop.f32.mrb[0].mxu0
      %v440 = vadd.f32 0.0, %v439
      %v441 = vpop.f32.mrb[0].mxu0
      %442 = vdwg.mxu0
      %v443 = vadd.f32 %v332, %v435
      %v444 = vadd.f32 %v333, %v440
      %445 = vst [vmem:[#allocation3] sm:$0xff] %v443
      %446 = vst [vmem:[#allocation3 + $0x8] sm:$0xff] %v444
    $region53: #{tpu_custom_call.1} parent=1 // pred_fallthru
      _
    // Predicated region
    $region54: #{tpu_custom_call.1} parent=1 // pred_check
      %p447 = pneg %p187
    $region55: #{tpu_custom_call.1} parent=1 // pred_check_branch
      %449 = sbr.rel (%p447) target = $region57
    $region56: #{tpu_custom_call.1} parent=1 // pred_region
      %v450 = vld [vmem:[#allocation3] sm:$0xff]
      %v451 = vld [vmem:[#allocation3 + $0x8] sm:$0xff]
      %v452 = vld [vmem:[#allocation10] sm:$0xff]
      %v453 = vld [vmem:[#allocation10 + $0x8] sm:$0xff]
      %v454 = vld [vmem:[#allocation10 + $0x10] sm:$0xff]
      %v455 = vld [vmem:[#allocation10 + $0x18] sm:$0xff]
      %v456 = vld [vmem:[#allocation10 + $0x20] sm:$0xff]
      %v457 = vld [vmem:[#allocation10 + $0x28] sm:$0xff]
      %v458 = vld [vmem:[#allocation10 + $0x30] sm:$0xff]
      %v459 = vld [vmem:[#allocation10 + $0x38] sm:$0xff]
      %v460 = vld [vmem:[#allocation10 + $0x40] sm:$0xff]
      %v461 = vld [vmem:[#allocation10 + $0x48] sm:$0xff]
      %v462 = vld [vmem:[#allocation10 + $0x50] sm:$0xff]
      %v463 = vld [vmem:[#allocation10 + $0x58] sm:$0xff]
      %v464 = vld [vmem:[#allocation10 + $0x60] sm:$0xff]
      %v465 = vld [vmem:[#allocation10 + $0x68] sm:$0xff]
      %v466 = vld [vmem:[#allocation10 + $0x70] sm:$0xff]
      %v467 = vld [vmem:[#allocation10 + $0x78] sm:$0xff]
      %468 = vmatprep.subr.mxu0 0.0
      %469 = vmatpush1.msra.mxu0 %v452
      %470 = vmatprep.subr.mxu0 0.0
      %471 = vmatpush1.msra.mxu0 %v453
      %472 = vmatprep.subr.mxu0 0.0
      %473 = vmatpush1.msra.mxu0 %v454
      %474 = vmatprep.subr.mxu0 0.0
      %475 = vmatpush1.msra.mxu0 %v455
      %476 = vmatprep.subr.mxu0 0.0
      %477 = vmatpush1.msra.mxu0 %v456
      %478 = vmatprep.subr.mxu0 0.0
      %479 = vmatpush1.msra.mxu0 %v457
      %480 = vmatprep.subr.mxu0 0.0
      %481 = vmatpush1.msra.mxu0 %v458
      %482 = vmatprep.subr.mxu0 0.0
      %483 = vmatpush1.msra.mxu0 %v459
      %484 = vmatprep.subr.mxu0 0.0
      %485 = vmatpush1.msra.mxu0 %v460
      %486 = vmatprep.subr.mxu0 0.0
      %487 = vmatpush1.msra.mxu0 %v461
      %488 = vmatprep.subr.mxu0 0.0
      %489 = vmatpush1.msra.mxu0 %v462
      %490 = vmatprep.subr.mxu0 0.0
      %491 = vmatpush1.msra.mxu0 %v463
      %492 = vmatprep.subr.mxu0 0.0
      %493 = vmatpush1.msra.mxu0 %v464
      %494 = vmatprep.subr.mxu0 0.0
      %495 = vmatpush1.msra.mxu0 %v465
      %496 = vmatprep.subr.mxu0 0.0
      %497 = vmatpush1.msra.mxu0 %v466
      %498 = vmatprep.subr.mxu0 0.0
      %499 = vmatpush1.msra.mxu0 %v467
      %500 = vmatprep.subr.mxu0 0.0
      %501 = vmatpush1.msra.mxu0 0.0
      %502 = vmatprep.subr.mxu0 0.0
      %503 = vmatpush1.msra.mxu0 0.0
      %504 = vmatprep.subr.mxu0 0.0
      %505 = vmatpush1.msra.mxu0 0.0
      %506 = vmatprep.subr.mxu0 0.0
      %507 = vmatpush1.msra.mxu0 0.0
      %508 = vmatprep.subr.mxu0 0.0
      %509 = vmatpush1.msra.mxu0 0.0
      %510 = vmatprep.subr.mxu0 0.0
      %511 = vmatpush1.msra.mxu0 0.0
      %512 = vmatprep.subr.mxu0 0.0
      %513 = vmatpush1.msra.mxu0 0.0
      %514 = vmatprep.subr.mxu0 0.0
      %515 = vmatpush1.msra.mxu0 0.0
      %516 = vmatprep.subr.mxu0 0.0
      %517 = vmatpush1.msra.mxu0 0.0
      %518 = vmatprep.subr.mxu0 0.0
      %519 = vmatpush1.msra.mxu0 0.0
      %520 = vmatprep.subr.mxu0 0.0
      %521 = vmatpush1.msra.mxu0 0.0
      %522 = vmatprep.subr.mxu0 0.0
      %523 = vmatpush1.msra.mxu0 0.0
      %524 = vmatprep.subr.mxu0 0.0
      %525 = vmatpush1.msra.mxu0 0.0
      %526 = vmatprep.subr.mxu0 0.0
      %527 = vmatpush1.msra.mxu0 0.0
      %528 = vmatprep.subr.mxu0 0.0
      %529 = vmatpush1.msra.mxu0 0.0
      %530 = vmatprep.subr.mxu0 0.0
      %531 = vmatpush1.msra.mxu0 0.0
      %532 = vmatprep.mubr.f32.mxu0 0.0
      %533 = vmatmul.mubr.f32.gmra.mrb[0].mxu0 %v450
      %v534 = vpop.f32.mrb[0].mxu0
      %v535 = vadd.f32 0.0, %v534
      %v536 = vpop.f32.mrb[0].mxu0
      %537 = vmatprep.mubr.f32.mxu0 0.0
      %538 = vmatmul.mubr.f32.gmra.mrb[0].mxu0 %v451
      %v539 = vpop.f32.mrb[0].mxu0
      %v540 = vadd.f32 0.0, %v539
      %v541 = vpop.f32.mrb[0].mxu0
      %542 = vdwg.mxu0
      %v543 = vld [vmem:[#allocation2] sm:$0xff]
      %v544 = vld [vmem:[#allocation2 + $0x8] sm:$0xff]
      %v545 = vadd.f32 %v543, %v535
      %v546 = vadd.f32 %v544, %v540
      %547 = vst [vmem:[#allocation12] sm:$0xff] %v545
      %548 = vst [vmem:[#allocation12 + $0x8] sm:$0xff] %v546
    $region57: #{tpu_custom_call.1} parent=1 // pred_fallthru
      _
    // Predicated region
    $region58: #{tpu_custom_call.1} parent=1 // pred_check
      _
    $region59: #{tpu_custom_call.1} parent=1 // pred_check_branch
      %550 = sbr.rel (0) target = $region61
    $region60: #{tpu_custom_call.1} parent=1 // pred_region
      %s552 = ssub.s32 256, 256
      %553 = vsyncadd [#allocation6], %s552
      %s554 = sshll.u32 [#allocation12], 4
      %s555 = int_to_ptr.vmem [resolvable:$true] %s554
      %560 = dma.vmem_to_hbm [thread:$0]  %s555, 256, %s5, [#allocation6], 128, 128, 8
    $region61: #{tpu_custom_call.1} parent=1 // pred_fallthru
      _
    // Predicated region
    $region62: #{tpu_custom_call.1} parent=1 // pred_check
      _
    $region63: #{tpu_custom_call.1} parent=1 // pred_check_branch
      %562 = sbr.rel (0) target = $region65
    $region64: #{tpu_custom_call.1} parent=1 // pred_region
      %563 = dma.done [#allocation6], 256
    $region65: #{tpu_custom_call.1} parent=1 // pred_fallthru
      _
    %564 = vsyncpa [#allocation5], 1
    %565 = vsyncpa [#allocation8], 1
    %566 = vsyncpa [#allocation11], 1
    %567 = vsyncpa [#allocation6], 1

</llo_original>
